<compile_context>
chip_gen: v7x
topology: tpu7x:2x2x1
jax: 0.10.0
libtpu: 0.0.40
codegen_flags: <defaults>
</compile_context>

<pallas_src>
import functools

import jax
import jax.numpy as jnp
from jax.experimental import pallas as pl
from jax.experimental.pallas import tpu as pltpu


def _round_down(x, m):
    return max(m, (x // m) * m)


def _vmem_capacity_bytes():
    try:
        return int(pltpu.get_tpu_info().vmem_capacity_bytes)
    except Exception:
        return 64 << 20  # conservative fallback = v7x per-core VMEM


# ----------------------------- Pallas kernel ------------------------------- #

def _focal_loss_kernel(logits_ref, tgt_ref, out_ref, acc_ref, *,
                       n_valid, alpha, gamma, block_n, class_major, need_mask):
    """One grid step processes `block_n` samples.

    class_major=True : logits_ref (C, bn), tgt_ref (1, bn), acc_ref (1, bn)
    class_major=False: logits_ref (bn, C), tgt_ref (bn, 1), acc_ref (bn, 1)
    out_ref: (1, 1) resident f32 scalar (same block index every step).
    """
    i = pl.program_id(0)
    last = pl.num_programs(0) - 1
    caxis = 0 if class_major else 1     # class axis
    baxis = 1 - caxis                   # batch / sample axis

    @pl.when(i == 0)
    def _init():
        acc_ref[...] = jnp.zeros_like(acc_ref)

    x = logits_ref[...].astype(jnp.float32)
    tgt = tgt_ref[...]

    # Numerically stable log-sum-exp along the class axis.
    m = jnp.max(x, axis=caxis, keepdims=True)
    e = jnp.exp(x - m)
    se = jnp.sum(e, axis=caxis, keepdims=True)
    lse = m + jnp.log(se)

    # Target logit via one-hot select -- pure VPU, no gather / DMA.
    cls = jax.lax.broadcasted_iota(jnp.int32, x.shape, caxis)
    hit = cls == tgt
    tgt_logit = jnp.sum(jnp.where(hit, x, 0.0), axis=caxis, keepdims=True)
    ce = lse - tgt_logit                                   # per-sample CE >= 0

    # pt = softmax prob of the true class; reuse e (no second EUP exp pass).
    e_tgt = jnp.sum(jnp.where(hit, e, 0.0), axis=caxis, keepdims=True)
    pt = e_tgt * pl.reciprocal(se, approx=True)
    one_minus_pt = jnp.maximum(1.0 - pt, 0.0)              # guard fp rounding
    fl = (one_minus_pt ** gamma) * ce                      # alpha in finalize

    if need_mask:
        # Only the final (partial) tile needs the row/lane mask.
        @pl.when(i < last)
        def _full_tile():
            acc_ref[...] += fl

        @pl.when(i == last)
        def _partial_tile():
            pos = jax.lax.broadcasted_iota(jnp.int32, fl.shape, baxis) + i * block_n
            acc_ref[...] += jnp.where(pos < n_valid, fl, 0.0)
    else:
        acc_ref[...] += fl

    @pl.when(i == last)
    def _finalize():
        # Single cross-lane/sublane reduce + mean + alpha, applied once.
        out_ref[...] = jnp.sum(acc_ref[...], keepdims=True) * (alpha / n_valid)


# ----------------------------- wrapper -------------------------------------- #

def focal_loss(logits, targets, alpha=1.0, gamma=2, max_block_n=None):
    """logits: (N, C) float, targets: (N,) int.  Returns scalar focal loss."""
    N, C = logits.shape
    itemsize = jnp.dtype(logits.dtype).itemsize

    class_major = C < 128            # batch on the 128-lane axis for small C
    align = 128 if class_major else 8

    # --- generation-aware tile size (VMEM budget, not a fixed 1024) ----------
    cap = _vmem_capacity_bytes()                        # physical VMEM / core
    budget = (cap * 2) // 5                             # our share, w/ headroom
    per_sample = 2 * (C * itemsize + 4) + 4             # dbl-buf inputs + scratch
    bn = _round_down(budget // per_sample, align)
    bn = min(bn, 1 << 17)                               # diminishing returns
    if max_block_n is not None:
        bn = min(bn, _round_down(int(max_block_n), align))
    if bn >= N:
        bn = N                                          # single-step fast path
    grid = pl.cdiv(N, bn)
    need_mask = (N % bn) != 0

    if class_major:
        logits_in = logits.T                            # (C, N): lanes = samples
        tgt_in = targets.astype(jnp.int32).reshape(1, N)
        logits_spec = pl.BlockSpec((C, bn), lambda i: (0, i))
        tgt_spec = pl.BlockSpec((1, bn), lambda i: (0, i))
        acc_shape = (1, bn)
    else:
        logits_in = logits                              # (N, C), C already lane-dense
        tgt_in = targets.astype(jnp.int32).reshape(N, 1)
        logits_spec = pl.BlockSpec((bn, C), lambda i: (i, 0))
        tgt_spec = pl.BlockSpec((bn, 1), lambda i: (i, 0))
        acc_shape = (bn, 1)

    gamma_c = int(gamma) if float(gamma).is_integer() else float(gamma)
    kernel = functools.partial(
        _focal_loss_kernel,
        n_valid=N, alpha=float(alpha), gamma=gamma_c,
        block_n=bn, class_major=class_major, need_mask=need_mask)

    out = pl.pallas_call(
        kernel,
        out_shape=jax.ShapeDtypeStruct((1, 1), jnp.float32),
        grid=(grid,),
        in_specs=[logits_spec, tgt_spec],
        out_specs=pl.BlockSpec((1, 1), lambda i: (0, 0)),   # resident scalar
        scratch_shapes=[pltpu.VMEM(acc_shape, jnp.float32)],
        compiler_params=pltpu.CompilerParams(
            dimension_semantics=("arbitrary",),              # reduction axis
            vmem_limit_bytes=int(min(cap * 3 // 4, 100 << 20))),
    )(logits_in, tgt_in)

    return out[0, 0]


# ----------------------------- pure-JAX reference ---------------------------- #

def _reference_focal_loss(logits, targets, alpha=1.0, gamma=2):
    logp = jax.nn.log_softmax(logits.astype(jnp.float32), axis=-1)
    ce = -jnp.take_along_axis(logp, targets[:, None].astype(jnp.int32), axis=-1)[:, 0]
    pt = jnp.exp(-ce)
    return jnp.mean(alpha * (1.0 - pt) ** gamma * ce)


# ----------------------------- main ------------------------------------------ #

if __name__ == "__main__":
    key = jax.random.PRNGKey(0)
    k1, k2, k3, k4, k5, k6 = jax.random.split(key, 6)
    # approx reciprocal in pt contributes up to ~1e-4 relative error in the mean
    RTOL, ATOL = 2e-3, 1e-6

    # Case 1: module-implied shapes -- small batch, few classes (class-major,
    # single-step fast path).
    N, C = 32, 10
    logits = 2.0 * jax.random.normal(k1, (N, C), jnp.float32)
    targets = jax.random.randint(k2, (N,), 0, C, jnp.int32)
    loss = jax.jit(focal_loss)(logits, targets)
    jax.block_until_ready(loss)
    ref = _reference_focal_loss(logits, targets)
    assert loss.shape == () and loss.dtype == jnp.float32
    assert jnp.allclose(loss, ref, rtol=RTOL, atol=ATOL), (loss, ref)

    # Case 2: forced small tile -> multi-step grid + masked partial last tile
    # (class-major path, N not a multiple of bn).
    N2, C2 = 1000, 6
    logits2 = jax.random.normal(k3, (N2, C2), jnp.float32)
    targets2 = jax.random.randint(k4, (N2,), 0, C2, jnp.int32)
    loss2 = jax.jit(functools.partial(focal_loss, max_block_n=256))(logits2, targets2)
    jax.block_until_ready(loss2)
    ref2 = _reference_focal_loss(logits2, targets2)
    assert jnp.allclose(loss2, ref2, rtol=RTOL, atol=ATOL), (loss2, ref2)

    # Case 3: large class count (C >= 128) -> row-major path, forced multi-step
    # with a masked partial tile.
    N3, C3 = 100, 160
    logits3 = jax.random.normal(k5, (N3, C3), jnp.float32)
    targets3 = jax.random.randint(k6, (N3,), 0, C3, jnp.int32)
    loss3 = jax.jit(functools.partial(focal_loss, max_block_n=48))(logits3, targets3)
    jax.block_until_ready(loss3)
    ref3 = _reference_focal_loss(logits3, targets3)
    assert jnp.allclose(loss3, ref3, rtol=RTOL, atol=ATOL), (loss3, ref3)

    # Case 4: bf16 logits accepted end-to-end (in-kernel cast to f32 for math).
    logits4 = logits.astype(jnp.bfloat16)
    loss4 = jax.jit(focal_loss)(logits4, targets)
    jax.block_until_ready(loss4)
    ref4 = _reference_focal_loss(logits4, targets)
    assert jnp.allclose(loss4, ref4, rtol=RTOL, atol=ATOL), (loss4, ref4)

    print("KERNEL_OK")
</pallas_src>

<mosaic_0001>
module attributes {stable_mosaic.version = 11 : i64} {
  func.func @_focal_loss_kernel(%arg0: i32, %arg1: memref<10x32xf32, #tpu.memory_space<vmem>>, %arg2: memref<1x32xi32, #tpu.memory_space<vmem>>, %arg3: memref<1x1xf32, #tpu.memory_space<vmem>>, %arg4: memref<1x32xf32, #tpu.memory_space<vmem>>) attributes {dimension_semantics = [#tpu.dimension_semantics<arbitrary>], iteration_bounds = array<i64: 1>, scalar_prefetch = 0 : i64, scratch_operands = 1 : i64, tpu.core_type = #tpu.core_type<tc>, window_params = [{transform_indices = @transform_0, window_bounds = array<i64: 10, 32>}, {transform_indices = @transform_1, window_bounds = array<i64: 1, 32>}, {pipeline_mode = #tpu.pipeline_mode<synchronous>, transform_indices = @transform_2, window_bounds = array<i64: 1, 1>}]} {
    %c0_i32 = arith.constant 0 : i32
    %0 = arith.cmpi eq, %arg0, %c0_i32 : i32
    %1 = arith.extui %0 : i1 to i32
    %c0_i32_0 = arith.constant 0 : i32
    %2 = arith.cmpi ne, %1, %c0_i32_0 : i32
    scf.if %2 {
      %cst_17 = arith.constant 0.000000e+00 : f32
      %40 = vector.broadcast %cst_17 : f32 to vector<1x32xf32>
      %c0_18 = arith.constant 0 : index
      %c0_19 = arith.constant 0 : index
      %41 = vector.load %arg4[%c0_18, %c0_19] : memref<1x32xf32, #tpu.memory_space<vmem>>, vector<1x32xf32>
      tpu.vector_store %arg4[%c0_18, %c0_19], %40 {strides = array<i32>} : memref<1x32xf32, #tpu.memory_space<vmem>>, vector<1x32xf32>,
    } else {
    }
    %c0 = arith.constant 0 : index
    %c0_1 = arith.constant 0 : index
    %3 = vector.load %arg1[%c0, %c0_1] : memref<10x32xf32, #tpu.memory_space<vmem>>, vector<10x32xf32>
    %c0_2 = arith.constant 0 : index
    %c0_3 = arith.constant 0 : index
    %4 = vector.load %arg2[%c0_2, %c0_3] : memref<1x32xi32, #tpu.memory_space<vmem>>, vector<1x32xi32>
    %cst = arith.constant dense<0xFF800000> : vector<32xf32>
    %5 = vector.multi_reduction <maximumf>, %3, %cst [0] : vector<10x32xf32> to vector<32xf32>
    %6 = vector.shape_cast %5 : vector<32xf32> to vector<1x32xf32>
    %7 = vector.broadcast %6 : vector<1x32xf32> to vector<10x32xf32>
    %8 = arith.subf %3, %7 : vector<10x32xf32>
    %9 = math.exp %8 : vector<10x32xf32>
    %cst_4 = arith.constant dense<0.000000e+00> : vector<32xf32>
    %10 = vector.multi_reduction <add>, %9, %cst_4 [0] : vector<10x32xf32> to vector<32xf32>
    %11 = vector.shape_cast %10 : vector<32xf32> to vector<1x32xf32>
    %12 = math.log %11 : vector<1x32xf32>
    %13 = arith.addf %6, %12 : vector<1x32xf32>
    %14 = tpu.iota {dimensions = array<i32: 0>} : vector<10x32xi32>
    %15 = vector.broadcast %4 : vector<1x32xi32> to vector<10x32xi32>
    %16 = arith.cmpi eq, %14, %15 : vector<10x32xi32>
    %cst_5 = arith.constant 0.000000e+00 : f32
    %17 = vector.broadcast %cst_5 : f32 to vector<10x32xf32>
    %18 = arith.select %16, %3, %17 : vector<10x32xi1>, vector<10x32xf32>
    %cst_6 = arith.constant dense<0.000000e+00> : vector<32xf32>
    %19 = vector.multi_reduction <add>, %18, %cst_6 [0] : vector<10x32xf32> to vector<32xf32>
    %20 = vector.shape_cast %19 : vector<32xf32> to vector<1x32xf32>
    %21 = arith.subf %13, %20 : vector<1x32xf32>
    %cst_7 = arith.constant 0.000000e+00 : f32
    %22 = vector.broadcast %cst_7 : f32 to vector<10x32xf32>
    %23 = arith.select %16, %9, %22 : vector<10x32xi1>, vector<10x32xf32>
    %cst_8 = arith.constant dense<0.000000e+00> : vector<32xf32>
    %24 = vector.multi_reduction <add>, %23, %cst_8 [0] : vector<10x32xf32> to vector<32xf32>
    %25 = vector.shape_cast %24 : vector<32xf32> to vector<1x32xf32>
    %26 = tpu.reciprocal %11 {approx = true} : vector<1x32xf32> -> vector<1x32xf32>
    %27 = arith.mulf %25, %26 : vector<1x32xf32>
    %cst_9 = arith.constant 1.000000e+00 : f32
    %28 = vector.broadcast %cst_9 : f32 to vector<1x32xf32>
    %29 = arith.subf %28, %27 : vector<1x32xf32>
    %cst_10 = arith.constant 0.000000e+00 : f32
    %30 = vector.broadcast %cst_10 : f32 to vector<1x32xf32>
    %31 = arith.maximumf %29, %30 : vector<1x32xf32>
    %32 = arith.mulf %31, %31 : vector<1x32xf32>
    %33 = arith.mulf %32, %21 : vector<1x32xf32>
    %c0_11 = arith.constant 0 : index
    %c0_12 = arith.constant 0 : index
    %34 = vector.load %arg4[%c0_11, %c0_12] : memref<1x32xf32, #tpu.memory_space<vmem>>, vector<1x32xf32>
    %35 = arith.addf %34, %33 : vector<1x32xf32>
    %c0_13 = arith.constant 0 : index
    %c0_14 = arith.constant 0 : index
    %36 = vector.load %arg4[%c0_13, %c0_14] : memref<1x32xf32, #tpu.memory_space<vmem>>, vector<1x32xf32>
    tpu.vector_store %arg4[%c0_13, %c0_14], %35 {strides = array<i32>} : memref<1x32xf32, #tpu.memory_space<vmem>>, vector<1x32xf32>,
    %c0_i32_15 = arith.constant 0 : i32
    %37 = arith.cmpi eq, %arg0, %c0_i32_15 : i32
    %38 = arith.extui %37 : i1 to i32
    %c0_i32_16 = arith.constant 0 : i32
    %39 = arith.cmpi ne, %38, %c0_i32_16 : i32
    scf.if %39 {
      %c0_17 = arith.constant 0 : index
      %c0_18 = arith.constant 0 : index
      %40 = vector.load %arg4[%c0_17, %c0_18] : memref<1x32xf32, #tpu.memory_space<vmem>>, vector<1x32xf32>
      %41 = vector.shape_cast %40 : vector<1x32xf32> to vector<1x1x32xf32>
      %cst_19 = arith.constant dense<0.000000e+00> : vector<1xf32>
      %42 = vector.multi_reduction <add>, %41, %cst_19 [1, 2] : vector<1x1x32xf32> to vector<1xf32>
      %43 = vector.shape_cast %42 : vector<1xf32> to vector<1x1x1xf32>
      %44 = vector.extract %43[0, 0, 0] : f32 from vector<1x1x1xf32>
      %45 = vector.broadcast %44 : f32 to vector<1x1xf32>
      %cst_20 = arith.constant 3.125000e-02 : f32
      %46 = vector.broadcast %cst_20 : f32 to vector<1x1xf32>
      %47 = arith.mulf %45, %46 : vector<1x1xf32>
      %c0_21 = arith.constant 0 : index
      %c0_22 = arith.constant 0 : index
      %48 = vector.load %arg3[%c0_21, %c0_22] : memref<1x1xf32, #tpu.memory_space<vmem>>, vector<1x1xf32>
      tpu.vector_store %arg3[%c0_21, %c0_22], %47 {strides = array<i32>} : memref<1x1xf32, #tpu.memory_space<vmem>>, vector<1x1xf32>,
    } else {
    }
    return
  }
  func.func @transform_0(%arg0: i32) -> (i32, i32) {
    %c0_i32 = arith.constant 0 : i32
    %c0_i32_0 = arith.constant 0 : i32
    return %c0_i32, %arg0 : i32, i32
  }
  func.func @transform_1(%arg0: i32) -> (i32, i32) {
    %c0_i32 = arith.constant 0 : i32
    %c0_i32_0 = arith.constant 0 : i32
    return %c0_i32, %arg0 : i32, i32
  }
  func.func @transform_2(%arg0: i32) -> (i32, i32) {
    %c0_i32 = arith.constant 0 : i32
    %c0_i32_0 = arith.constant 0 : i32
    %c0_i32_1 = arith.constant 0 : i32
    return %c0_i32, %c0_i32_0 : i32, i32
  }
}

</mosaic_0001>

<llo_original>
// kernel: focal_loss.1
$region0: #{focal_loss.1}
  #allocation0 [shape = 'u32[]', space=smem, size = 0x4, offset = 0x4, fixed_abs, tag = 'smem constant byte address 0x4 - core index']
  #allocation1 [shape = 'u32[144,128]{1,0:T(1,128)}', space=vmem, size = 0x12000, scoped, tag = 'internal scratch']
  #allocation2 [shape = 'f32[1,32]{1,0:T(1,128)}', space=vmem, size = 0x200, scoped, tag = 'scratch operand']
  %s0 = inlined_call_operand.hbm [shape: f32[10,32], index: 0, kind: input, shape index: {}]
  %s1 = inlined_call_operand.vmem [shape: s32[1,32], index: 1, kind: input, shape index: {}]
  %s2 = inlined_call_operand.hbm [shape: f32[1,1], index: 2, kind: output, shape index: {}]
  %s3 = sld [smem:[#allocation0]]
  $region30: #{focal_loss.1} parent=0
    _
  %s5 = ssub.s32 1, %s3
  %s6 = scalar_select 0, %s5, %s3
  $region1: #{focal_loss.1} parent=0
    #allocation3 [shape = 'u8[8192]{0}', space=vmem, size = 0x2000, scoped, tag = 'input window, operand 0, single buffered']
    #allocation4 [shape = 's32[1]{0}', space=sflag, size = 0x4, scoped, tag = 'scoped memory for focal_loss.1']
    #allocation5 [shape = 's32[1]{0}', space=sflag, size = 0x4, scoped, tag = 'scoped memory for focal_loss.1']
    #allocation6 [shape = 'u8[512]{0}', space=vmem, size = 0x400, scoped, tag = 'output window, operand 0, single buffered']
    %7 = vsyncpa [#allocation4], 0
    %8 = vsyncpa [#allocation5], 0
    // Predicated region
    $region2: #{focal_loss.1} parent=1 // pred_check
      _
    $region3: #{focal_loss.1} parent=1 // pred_check_branch
      %10 = sbr.rel (0) target = $region5
    $region4: #{focal_loss.1} parent=1 // pred_region
      %s12 = ssub.s32 256, 256
      %13 = vsyncadd [#allocation4], %s12
      %s14 = sshll.u32 [#allocation3], 4
      %s15 = int_to_ptr.vmem [resolvable:$true] %s14
      %20 = dma.hbm_to_vmem [thread:$0]  %s0, 256, %s15, [#allocation4], 128, 128, 8
    $region5: #{focal_loss.1} parent=1 // pred_fallthru
      _
    // Predicated region
    $region6: #{focal_loss.1} parent=1 // pred_check
      _
    $region7: #{focal_loss.1} parent=1 // pred_check_branch
      %22 = sbr.rel (0) target = $region9
    $region8: #{focal_loss.1} parent=1 // pred_region
      _
    $region9: #{focal_loss.1} parent=1 // pred_fallthru
      _
    // Predicated region
    $region10: #{focal_loss.1} parent=1 // pred_check
      _
    $region11: #{focal_loss.1} parent=1 // pred_check_branch
      %24 = sbr.rel (0) target = $region13
    $region12: #{focal_loss.1} parent=1 // pred_region
      %25 = dma.done [#allocation4], 256
    $region13: #{focal_loss.1} parent=1 // pred_fallthru
      _
    %p26 = scmp.eq.s32.totalorder 0, 0
    // Predicated region
    $region14: #{focal_loss.1} parent=1 // pred_check
      %p27 = pneg %p26
    $region15: #{focal_loss.1} parent=1 // pred_check_branch
      %29 = sbr.rel (%p27) target = $region17
    $region16: #{focal_loss.1} parent=1 // pred_region
      %vm30 = vcmask 253952
      %31 = vst.msk [vmem:[#allocation2] sm:$0x1] %vm30, 0.0
    $region17: #{focal_loss.1} parent=1 // pred_fallthru
      _
    %v32 = vld [vmem:[#allocation3] sm:$0xff]
    %v33 = vld [vmem:[#allocation3 + $0x8] sm:$0x3]
    %v34 = vld [vmem:[%s1] sm:$0x1]
    %vm35 = vcmask 261120
    %v36 = vsel %vm35, %v32, -inf
    %vm37 = vcmask 254976
    %v38 = vsel %vm37, %v33, -inf
    %v39 = vmax.f32 %v36, %v38
    %v40 = vrot.slane %v39, 4
    %v41 = vmax.f32 %v39, %v40
    %v42 = vrot.slane %v41, 2
    %v43 = vmax.f32 %v41, %v42
    %v44 = vrot.slane %v43, 1
    %v45 = vmax.f32 %v43, %v44
    %v46 = vsub.f32 %v32, %v45
    %v47 = vsub.f32 %v33, %v45
    %v48 = vmul.f32 %v46, 1.442695
    %v49 = vpow.pop %v48
    %v50 = vmul.f32 %v47, 1.442695
    %v51 = vpow.pop %v50
    %v52 = vsel %vm35, %v49, 0.0
    %v53 = vsel %vm37, %v51, 0.0
    %v54 = vadd.f32 %v52, %v53
    %v55 = vrot.slane %v54, 4
    %v56 = vadd.f32 %v54, %v55
    %v57 = vrot.slane %v56, 2
    %v58 = vadd.f32 %v56, %v57
    %v59 = vrot.slane %v58, 1
    %v60 = vadd.f32 %v58, %v59
    %v61 = vlog2.pop %v60
    %v62 = vmul.f32 %v61, 0.6931472
    %v63 = vadd.f32 %v45, %v62
    %v64 = vlaneseq
    %v65 = vshrl.u32 %v64, 7
    %v66 = vadd.s32 %v65, 8
    %v67 = vlaneseq
    %v68 = vshrl.u32 %v67, 7
    %v69 = vsub.s32 0, %v68
    %v70 = vrot.slane %v34, %v69
    %vm71 = vcmp.eq.s32.totalorder %v65, %v70
    %vm72 = vcmp.eq.s32.totalorder %v66, %v70
    %v73 = vsel %vm71, %v32, 0.0
    %v74 = vsel %vm72, %v33, 0.0
    %v75 = vsel %vm35, %v73, 0.0
    %v76 = vsel %vm37, %v74, 0.0
    %v77 = vadd.f32 %v75, %v76
    %v78 = vrot.slane %v77, 4
    %v79 = vadd.f32 %v77, %v78
    %v80 = vrot.slane %v79, 2
    %v81 = vadd.f32 %v79, %v80
    %v82 = vrot.slane %v81, 1
    %v83 = vadd.f32 %v81, %v82
    %v84 = vsub.f32 %v63, %v83
    %v85 = vsel %vm71, %v49, 0.0
    %v86 = vsel %vm72, %v51, 0.0
    %v87 = vsel %vm35, %v85, 0.0
    %v88 = vsel %vm37, %v86, 0.0
    %v89 = vadd.f32 %v87, %v88
    %v90 = vrot.slane %v89, 4
    %v91 = vadd.f32 %v89, %v90
    %v92 = vrot.slane %v91, 2
    %v93 = vadd.f32 %v91, %v92
    %v94 = vrot.slane %v93, 1
    %v95 = vadd.f32 %v93, %v94
    %v96 = vrcp.pop %v60
    %v97 = vmul.f32 %v95, %v96
    %v98 = vsub.f32 1.0, %v97
    %v99 = vmax.f32 %v98, 0.0
    %v100 = vmul.f32 %v99, %v99
    %v101 = vmul.f32 %v100, %v84
    %v102 = vld [vmem:[#allocation2] sm:$0x1]
    %v103 = vadd.f32 %v102, %v101
    %vm104 = vcmask 253952
    %105 = vst.msk [vmem:[#allocation2] sm:$0x1] %vm104, %v103
    // Predicated region
    $region18: #{focal_loss.1} parent=1 // pred_check
      %p106 = pneg %p26
    $region19: #{focal_loss.1} parent=1 // pred_check_branch
      %108 = sbr.rel (%p106) target = $region21
    $region20: #{focal_loss.1} parent=1 // pred_region
      %v109 = vld [vmem:[#allocation2] sm:$0x1]
      %v110 = vsel %vm104, %v109, 0.0
      %111 = vadd.xlane.f32.xlu0 %v110
      %v112 = vpop.xlane.xlu0 %111
      %v113 = vrot.slane %v112, 4
      %v114 = vadd.f32 %v112, %v113
      %v115 = vrot.slane %v114, 2
      %v116 = vadd.f32 %v114, %v115
      %v117 = vrot.slane %v116, 1
      %v118 = vadd.f32 %v116, %v117
      %s119 = vtos %v118
      %v120 = vstv %s119
      %v121 = vmul.f32 %v120, 0.03125
      %vm122 = vcmask 0
      %123 = vst.msk [vmem:[#allocation6] sm:$0x1] %vm122, %v121
    $region21: #{focal_loss.1} parent=1 // pred_fallthru
      _
    // Predicated region
    $region22: #{focal_loss.1} parent=1 // pred_check
      _
    $region23: #{focal_loss.1} parent=1 // pred_check_branch
      %125 = sbr.rel (0) target = $region25
    $region24: #{focal_loss.1} parent=1 // pred_region
      %s127 = ssub.s32 16, 16
      %128 = vsyncadd [#allocation5], %s127
      %s130 = sshll.u32 [#allocation6], 4
      %s131 = int_to_ptr.vmem [resolvable:$true] %s130
      %133 = dma.vmem_to_hbm [thread:$0]  %s131, 16, %s2, [#allocation5]
    $region25: #{focal_loss.1} parent=1 // pred_fallthru
      _
    // Predicated region
    $region26: #{focal_loss.1} parent=1 // pred_check
      _
    $region27: #{focal_loss.1} parent=1 // pred_check_branch
      %135 = sbr.rel (0) target = $region29
    $region28: #{focal_loss.1} parent=1 // pred_region
      %136 = dma.done [#allocation5], 16
    $region29: #{focal_loss.1} parent=1 // pred_fallthru
      _
    %137 = vsyncpa [#allocation4], 1
    %138 = vsyncpa [#allocation5], 1

</llo_original>
